<compile_context>
chip_gen: v5e
topology: v5e:2x2
jax: 0.10.0
libtpu: 0.0.40
codegen_flags: <defaults>
</compile_context>

<pallas_src>
import functools
import math

import jax
import jax.numpy as jnp
from jax import lax
from jax.experimental import pallas as pl
from jax.experimental.pallas import tpu as pltpu

_VMEM_LIMIT = 48 * 1024 * 1024  # safe on v5e/v6e (128 MiB) and v7x (64 MiB)


# ----------------------------- tile selection --------------------------------

def _pick_tile(dim, target, granule):
    """Largest tile <= target that divides dim and is a multiple of `granule`
    (or the full dim if dim <= target / no aligned divisor exists)."""
    if dim <= target:
        return dim
    t = (target // granule) * granule
    while t >= granule:
        if dim % t == 0:
            return t
        t -= granule
    return dim


# ----------------------------- Pallas kernels --------------------------------

def linear_kernel(x_ref, w_ref, b_ref, o_ref, acc_ref):
    """(tm,tk) @ (tk,tn) + (1,tn); K-reduction on grid axis 2, f32 accumulator."""
    @pl.when(pl.program_id(2) == 0)
    def _():
        acc_ref[...] = jnp.zeros_like(acc_ref)

    acc_ref[...] += jnp.dot(x_ref[...], w_ref[...],
                            preferred_element_type=jnp.float32)

    @pl.when(pl.program_id(2) == pl.num_programs(2) - 1)
    def _():
        o_ref[...] = (acc_ref[...] + b_ref[...]).astype(o_ref.dtype)


def flash_attn_kernel(q_ref, k_ref, v_ref, o_ref, m_ref, l_ref, acc_ref, *, scale):
    """Online-softmax attention for one (batch, head, q-block); KV axis = grid axis 3.
    q_ref/o_ref: (tq, d_k);  k_ref/v_ref: (tkv, d_k)."""
    kv = pl.program_id(3)

    @pl.when(kv == 0)
    def _():
        m_ref[...] = jnp.full_like(m_ref, -jnp.inf)
        l_ref[...] = jnp.zeros_like(l_ref)
        acc_ref[...] = jnp.zeros_like(acc_ref)

    # Scale q (tq*d_k mults) rather than the tq*tkv score matrix.
    q = q_ref[...] * scale
    # Contract over the last dim of both operands: no explicit k.T / XLU transpose.
    s = lax.dot_general(q, k_ref[...],
                        dimension_numbers=(((1,), (1,)), ((), ())),
                        preferred_element_type=jnp.float32)      # (tq, tkv), f32

    m_prev = m_ref[...]
    m_new = jnp.maximum(m_prev, jnp.max(s, axis=-1, keepdims=True))
    alpha = jnp.exp(m_prev - m_new)                               # EUP
    p = jnp.exp(s - m_new)                                        # f32, EUP
    l_ref[...] = alpha * l_ref[...] + jnp.sum(p, axis=-1, keepdims=True)
    # Keep the PV matmul on the input-dtype MXU path, accumulate in f32.
    acc_ref[...] = alpha * acc_ref[...] + jnp.dot(
        p.astype(v_ref.dtype), v_ref[...], preferred_element_type=jnp.float32)
    m_ref[...] = m_new

    @pl.when(kv == pl.num_programs(3) - 1)
    def _():
        inv_l = pl.reciprocal(l_ref[...], approx=True)            # EUP slot
        o_ref[...] = (acc_ref[...] * inv_l).astype(o_ref.dtype)


# -------------------------------- wrappers ------------------------------------

def pallas_linear(x2d, w, b, *, tm_target=256, tn_target=256, tk_target=512):
    """Tiled, pipelined x2d @ w + b with f32 accumulation.  x2d: (M,K), w: (K,N)."""
    M, K = x2d.shape
    K2, N = w.shape
    assert K == K2 and b.shape == (N,)
    tm = _pick_tile(M, tm_target, 8)
    tn = _pick_tile(N, tn_target, 128)
    tk = _pick_tile(K, tk_target, 128)
    grid = (M // tm, N // tn, K // tk)

    itemsize = jnp.dtype(x2d.dtype).itemsize
    cost = pl.CostEstimate(
        flops=2 * M * N * K,
        transcendentals=0,
        bytes_accessed=(M * K + K * N + M * N + N) * itemsize,
    )

    return pl.pallas_call(
        linear_kernel,
        out_shape=jax.ShapeDtypeStruct((M, N), x2d.dtype),
        grid_spec=pltpu.PrefetchScalarGridSpec(
            num_scalar_prefetch=0,
            grid=grid,
            in_specs=[
                pl.BlockSpec((tm, tk), lambda i, j, k: (i, k)),
                pl.BlockSpec((tk, tn), lambda i, j, k: (k, j)),
                pl.BlockSpec((1, tn), lambda i, j, k: (0, j)),
            ],
            out_specs=pl.BlockSpec((tm, tn), lambda i, j, k: (i, j)),
            scratch_shapes=[pltpu.VMEM((tm, tn), jnp.float32)],
        ),
        compiler_params=pltpu.CompilerParams(
            dimension_semantics=("parallel", "parallel", "arbitrary"),
            vmem_limit_bytes=_VMEM_LIMIT,
        ),
        cost_estimate=cost,
    )(x2d, w, b.reshape(1, N))


def pallas_flash_attention(q_buf, k_buf, v_buf, num_heads, d_k, *,
                           q_off=0, k_off=0, v_off=0,
                           tq_target=256, tkv_target=512):
    """Flash attention over head-column-blocked buffers.

    q_buf: (B, Sq, Wq), k_buf/v_buf: (B, Skv, Wk/Wv).  Head h of Q lives at column
    block (q_off + h) of q_buf (block width d_k), and analogously for K/V.  This
    covers both the fused self-attention layout (q_buf == k_buf == v_buf == QKV with
    offsets 0, H, 2H) and separate cross-attention projections (offsets 0, 0, 0).
    Returns (B, Sq, H*d_k) with heads merged (head h at column block h)."""
    B, Sq, _ = q_buf.shape
    Skv = k_buf.shape[1]
    H = num_heads
    d_model = H * d_k
    # Head-column addressing via BlockSpec needs lane-aligned head width.
    assert d_k % 128 == 0, "d_k must be a multiple of 128 for this layout"

    scale = 1.0 / math.sqrt(d_k)
    tq = _pick_tile(Sq, tq_target, 8)
    tkv = _pick_tile(Skv, tkv_target, 8)
    grid = (B, H, Sq // tq, Skv // tkv)

    # Head split folded into index_maps (column-block units of d_k).
    q_spec = pl.BlockSpec((None, tq, d_k), lambda b, h, qi, ki: (b, qi, q_off + h))
    k_spec = pl.BlockSpec((None, tkv, d_k), lambda b, h, qi, ki: (b, ki, k_off + h))
    v_spec = pl.BlockSpec((None, tkv, d_k), lambda b, h, qi, ki: (b, ki, v_off + h))
    # Head merge folded into the output index_map: head h -> column block h of a
    # lane-dense (B, Sq, d_model) buffer.
    o_spec = pl.BlockSpec((None, tq, d_k), lambda b, h, qi, ki: (b, qi, h))

    itemsize = jnp.dtype(q_buf.dtype).itemsize
    cost = pl.CostEstimate(
        flops=4 * B * H * Sq * Skv * d_k,
        transcendentals=B * H * Sq * Skv,
        bytes_accessed=(B * Sq * d_model + 2 * B * Skv * d_model
                        + B * Sq * d_model) * itemsize,
    )

    kernel = functools.partial(flash_attn_kernel, scale=scale)
    return pl.pallas_call(
        kernel,
        out_shape=jax.ShapeDtypeStruct((B, Sq, d_model), q_buf.dtype),
        grid_spec=pltpu.PrefetchScalarGridSpec(
            num_scalar_prefetch=0,
            grid=grid,
            in_specs=[q_spec, k_spec, v_spec],
            out_specs=o_spec,
            scratch_shapes=[
                pltpu.VMEM((tq, 1), jnp.float32),    # running max m
                pltpu.VMEM((tq, 1), jnp.float32),    # running denom l
                pltpu.VMEM((tq, d_k), jnp.float32),  # output accumulator
            ],
        ),
        compiler_params=pltpu.CompilerParams(
            dimension_semantics=("parallel", "parallel", "parallel", "arbitrary"),
            vmem_limit_bytes=_VMEM_LIMIT,
        ),
        cost_estimate=cost,
    )(q_buf, k_buf, v_buf)


def multi_head_attention(params, Q, K, V, num_heads):
    """Pallas implementation of MultiHeadAttention.forward (mask=None)."""
    B, Sq, d_model = Q.shape
    Skv = K.shape[1]
    d_k = d_model // num_heads
    H = num_heads

    if (Q is K) and (K is V):
        # Self-attention: fused QKV GEMM — the activation is read from HBM once and
        # the output is lane-dense (width 3*d_model).
        qkv2d = pallas_linear(Q.reshape(B * Sq, d_model),
                              params["Wqkv"], params["bqkv"])
        qkv = qkv2d.reshape(B, Sq, 3 * d_model)        # free view, no transpose
        attn = pallas_flash_attention(qkv, qkv, qkv, H, d_k,
                                      q_off=0, k_off=H, v_off=2 * H)
    else:
        # Cross-attention: separate projections, consumed directly by the attention
        # kernel (no HBM concatenation of Q/K/V).
        q3 = pallas_linear(Q.reshape(B * Sq, d_model),
                           params["Wq"], params["bq"]).reshape(B, Sq, d_model)
        k3 = pallas_linear(K.reshape(B * Skv, d_model),
                           params["Wk"], params["bk"]).reshape(B, Skv, d_model)
        v3 = pallas_linear(V.reshape(B * Skv, d_model),
                           params["Wv"], params["bv"]).reshape(B, Skv, d_model)
        attn = pallas_flash_attention(q3, k3, v3, H, d_k)

    out = pallas_linear(attn.reshape(B * Sq, d_model), params["Wo"], params["bo"])
    return out.reshape(B, Sq, d_model)


# --------------------------- pure-JAX reference --------------------------------

def reference_mha(params, Q, K, V, num_heads):
    B, Sq, d_model = Q.shape
    Skv = K.shape[1]
    d_k = d_model // num_heads

    def proj(x, w, b, s):
        y = x @ w + b
        return y.reshape(B, s, num_heads, d_k).transpose(0, 2, 1, 3)

    q = proj(Q, params["Wq"], params["bq"], Sq)
    k = proj(K, params["Wk"], params["bk"], Skv)
    v = proj(V, params["Wv"], params["bv"], Skv)
    s = jnp.einsum("bhqd,bhkd->bhqk", q, k) / math.sqrt(d_k)
    w = jax.nn.softmax(s, axis=-1)
    a = jnp.einsum("bhqk,bhkd->bhqd", w, v)
    a = a.transpose(0, 2, 1, 3).reshape(B, Sq, d_model)
    return a @ params["Wo"] + params["bo"]


# ------------------------------------ main --------------------------------------

if __name__ == "__main__":
    # d_k = d_model / num_heads = 128 keeps head-column blocks lane-aligned.
    batch, seq_q, seq_kv, d_model, num_heads = 2, 8, 16, 256, 2

    key = jax.random.PRNGKey(0)
    ks = jax.random.split(key, 12)
    init = lambda k, shape: jax.random.normal(k, shape, jnp.float32) * 0.05

    params = {
        "Wq": init(ks[0], (d_model, d_model)), "bq": init(ks[1], (d_model,)),
        "Wk": init(ks[2], (d_model, d_model)), "bk": init(ks[3], (d_model,)),
        "Wv": init(ks[4], (d_model, d_model)), "bv": init(ks[5], (d_model,)),
        "Wo": init(ks[6], (d_model, d_model)), "bo": init(ks[7], (d_model,)),
    }
    # Fused [Wq|Wk|Wv] built once at parameter setup (would be done at load time).
    params["Wqkv"] = jnp.concatenate([params["Wq"], params["Wk"], params["Wv"]], axis=1)
    params["bqkv"] = jnp.concatenate([params["bq"], params["bk"], params["bv"]])

    X = jax.random.normal(ks[8], (batch, seq_q, d_model), jnp.float32)
    Kin = jax.random.normal(ks[9], (batch, seq_kv, d_model), jnp.float32)
    Vin = jax.random.normal(ks[10], (batch, seq_kv, d_model), jnp.float32)

    # Tolerance accounts for the approximate EUP reciprocal in the softmax normalizer.
    TOL = dict(atol=2e-2, rtol=2e-2)

    # Self-attention (fused QKV path).
    out_self = jax.block_until_ready(multi_head_attention(params, X, X, X, num_heads))
    ref_self = reference_mha(params, X, X, X, num_heads)
    assert out_self.shape == (batch, seq_q, d_model)
    assert jnp.allclose(out_self, ref_self, **TOL), "self-attention mismatch"

    # Cross-attention (separate Q/K/V projections, Skv != Sq).
    out_x = jax.block_until_ready(multi_head_attention(params, X, Kin, Vin, num_heads))
    ref_x = reference_mha(params, X, Kin, Vin, num_heads)
    assert out_x.shape == (batch, seq_q, d_model)
    assert jnp.allclose(out_x, ref_x, **TOL), "cross-attention mismatch"

    print("KERNEL_OK")
</pallas_src>

<mosaic_0001>
module attributes {stable_mosaic.version = 11 : i64} {
  func.func @linear_kernel(%arg0: i32, %arg1: i32, %arg2: i32, %arg3: memref<16x256xf32, #tpu.memory_space<vmem>>, %arg4: memref<256x256xf32, #tpu.memory_space<vmem>>, %arg5: memref<1x256xf32, #tpu.memory_space<vmem>>, %arg6: memref<16x256xf32, #tpu.memory_space<vmem>>, %arg7: memref<16x256xf32, #tpu.memory_space<vmem>>) attributes {dimension_semantics = [#tpu.dimension_semantics<parallel>, #tpu.dimension_semantics<parallel>, #tpu.dimension_semantics<arbitrary>], iteration_bounds = array<i64: 1, 3, 1>, scalar_prefetch = 0 : i64, scratch_operands = 1 : i64, tpu.core_type = #tpu.core_type<tc>, window_params = [{transform_indices = @transform_0, window_bounds = array<i64: 16, 256>}, {transform_indices = @transform_1, window_bounds = array<i64: 256, 256>}, {transform_indices = @transform_2, window_bounds = array<i64: 1, 256>}, {transform_indices = @transform_3, window_bounds = array<i64: 16, 256>}]} {
    %c0_i32 = arith.constant 0 : i32
    %0 = arith.cmpi eq, %arg2, %c0_i32 : i32
    %1 = arith.extui %0 : i1 to i32
    %c0_i32_0 = arith.constant 0 : i32
    %2 = arith.cmpi ne, %1, %c0_i32_0 : i32
    scf.if %2 {
      %cst_10 = arith.constant 0.000000e+00 : f32
      %12 = vector.broadcast %cst_10 : f32 to vector<16x256xf32>
      %c0_11 = arith.constant 0 : index
      %c0_12 = arith.constant 0 : index
      %13 = vector.load %arg7[%c0_11, %c0_12] : memref<16x256xf32, #tpu.memory_space<vmem>>, vector<16x256xf32>
      tpu.vector_store %arg7[%c0_11, %c0_12], %12 {strides = array<i32>} : memref<16x256xf32, #tpu.memory_space<vmem>>, vector<16x256xf32>,
    } else {
    }
    %c0 = arith.constant 0 : index
    %c0_1 = arith.constant 0 : index
    %3 = vector.load %arg7[%c0, %c0_1] : memref<16x256xf32, #tpu.memory_space<vmem>>, vector<16x256xf32>
    %c0_2 = arith.constant 0 : index
    %c0_3 = arith.constant 0 : index
    %4 = vector.load %arg3[%c0_2, %c0_3] : memref<16x256xf32, #tpu.memory_space<vmem>>, vector<16x256xf32>
    %c0_4 = arith.constant 0 : index
    %c0_5 = arith.constant 0 : index
    %5 = vector.load %arg4[%c0_4, %c0_5] : memref<256x256xf32, #tpu.memory_space<vmem>>, vector<256x256xf32>
    %cst = arith.constant dense<0.000000e+00> : vector<16x256xf32>
    %6 = tpu.matmul %4, %5, %cst {dimension_numbers = #tpu.dot_dimension_numbers<[1], [0], [0], [1], [0, 0, 1, 1], [], []>} : vector<16x256xf32>, vector<256x256xf32>, vector<16x256xf32> -> vector<16x256xf32>
    %7 = arith.addf %3, %6 : vector<16x256xf32>
    %c0_6 = arith.constant 0 : index
    %c0_7 = arith.constant 0 : index
    %8 = vector.load %arg7[%c0_6, %c0_7] : memref<16x256xf32, #tpu.memory_space<vmem>>, vector<16x256xf32>
    tpu.vector_store %arg7[%c0_6, %c0_7], %7 {strides = array<i32>} : memref<16x256xf32, #tpu.memory_space<vmem>>, vector<16x256xf32>,
    %c0_i32_8 = arith.constant 0 : i32
    %9 = arith.cmpi eq, %arg2, %c0_i32_8 : i32
    %10 = arith.extui %9 : i1 to i32
    %c0_i32_9 = arith.constant 0 : i32
    %11 = arith.cmpi ne, %10, %c0_i32_9 : i32
    scf.if %11 {
      %c0_10 = arith.constant 0 : index
      %c0_11 = arith.constant 0 : index
      %12 = vector.load %arg7[%c0_10, %c0_11] : memref<16x256xf32, #tpu.memory_space<vmem>>, vector<16x256xf32>
      %c0_12 = arith.constant 0 : index
      %c0_13 = arith.constant 0 : index
      %13 = vector.load %arg5[%c0_12, %c0_13] : memref<1x256xf32, #tpu.memory_space<vmem>>, vector<1x256xf32>
      %14 = vector.broadcast %13 : vector<1x256xf32> to vector<16x256xf32>
      %15 = arith.addf %12, %14 : vector<16x256xf32>
      %c0_14 = arith.constant 0 : index
      %c0_15 = arith.constant 0 : index
      %16 = vector.load %arg6[%c0_14, %c0_15] : memref<16x256xf32, #tpu.memory_space<vmem>>, vector<16x256xf32>
      tpu.vector_store %arg6[%c0_14, %c0_15], %15 {strides = array<i32>} : memref<16x256xf32, #tpu.memory_space<vmem>>, vector<16x256xf32>,
    } else {
    }
    return
  }
  func.func @transform_0(%arg0: i32, %arg1: i32, %arg2: i32) -> (i32, i32) {
    %c0_i32 = arith.constant 0 : i32
    return %arg0, %arg2 : i32, i32
  }
  func.func @transform_1(%arg0: i32, %arg1: i32, %arg2: i32) -> (i32, i32) {
    %c0_i32 = arith.constant 0 : i32
    return %arg2, %arg1 : i32, i32
  }
  func.func @transform_2(%arg0: i32, %arg1: i32, %arg2: i32) -> (i32, i32) {
    %c0_i32 = arith.constant 0 : i32
    %c0_i32_0 = arith.constant 0 : i32
    return %c0_i32, %arg1 : i32, i32
  }
  func.func @transform_3(%arg0: i32, %arg1: i32, %arg2: i32) -> (i32, i32) {
    %c0_i32 = arith.constant 0 : i32
    return %arg0, %arg1 : i32, i32
  }
}

</mosaic_0001>

<llo_original>
// kernel: tpu_custom_call.1
$region0: #{tpu_custom_call.1}
  #allocation0 [shape = 'u32[]', space=smem, size = 0x4, offset = 0x4, fixed_abs, tag = 'smem constant byte address 0x4 - core index']
  #allocation1 [shape = 'u32[72,128]{1,0:T(1,128)}', space=vmem, size = 0x9000, scoped, tag = 'internal scratch']
  #allocation2 [shape = 'f32[16,256]{1,0:T(8,128)}', space=vmem, size = 0x4000, scoped, tag = 'scratch operand']
  %s0 = inlined_call_operand.hbm [shape: f32[16,256], index: 0, kind: input, shape index: {}]
  %s1 = inlined_call_operand.hbm [shape: f32[256,768], index: 1, kind: input, shape index: {}]
  %s2 = inlined_call_operand.hbm [shape: f32[1,768], index: 2, kind: input, shape index: {}]
  %s3 = inlined_call_operand.hbm [shape: f32[16,768], index: 3, kind: output, shape index: {}]
  %s4 = sld [smem:[#allocation0]]
  $region65: #{tpu_custom_call.1} parent=0
    _
  %s6 = ssub.s32 1, %s4
  %s7 = scalar_select 0, %s6, %s4
  $region1: #{tpu_custom_call.1} parent=0
    #allocation3 [shape = 'u8[16384]{0}', space=vmem, size = 0x4000, scoped, tag = 'input window, operand 0, single buffered']
    #allocation4 [shape = 's32[2]{0}', space=sflag, size = 0x8, scoped, tag = 'scoped memory for tpu_custom_call.1']
    #allocation5 [shape = 's32[2]{0}', space=sflag, size = 0x8, scoped, tag = 'scoped memory for tpu_custom_call.1']
    #allocation6 [shape = 'u8[524288]{0}', space=vmem, size = 0x80000, scoped, tag = 'input window, operand 1']
    #allocation7 [shape = 's32[2]{0}', space=sflag, size = 0x8, scoped, tag = 'scoped memory for tpu_custom_call.1']
    #allocation8 [shape = 'u8[2048]{0}', space=vmem, size = 0x800, scoped, tag = 'input window, operand 2']
    #allocation9 [shape = 'u8[32768]{0}', space=vmem, size = 0x8000, scoped, tag = 'output window, operand 0']
    %8 = vsyncpa [#allocation4], 0
    %9 = vsyncpa [#allocation7], 0
    %s10 = scalar_lea.sflag [#allocation7], 1
    %11 = vsyncpa %s10, 0
    %12 = vsyncpa [#allocation5], 0
    %s13 = scalar_lea.sflag [#allocation5], 1
    %14 = vsyncpa %s13, 0
    loop: start=0, step=1, limit=5
    $region2: #{tpu_custom_call.1} parent=1 // loop_pre_header
      _
    $region3: #{tpu_custom_call.1} parent=1 // loop_header
      %s16 = sphi 0, %s20
      %p17 = scmp.ge.s32.totalorder %s16, 5
      %s23 = sphi 0, %s42
      %s24 = sphi 0, %s38
      %s25 = sphi 0, %s34
      %s26 = sphi 0, %s23
      %s27 = sphi 0, %s24
      %s28 = sphi 0, %s25
      %s29 = sphi 0, %s26
      %s30 = sphi 0, %s27
      %s31 = sphi 0, %s28
      %s47 = sphi 0, %s49
      %s50 = sphi 0, %s47
      %s51 = sphi 0, %s50
      %s67 = sphi 0, %s51
      %s75 = sphi 0, %s77
      %s78 = sphi 0, %s75
      %s79 = sphi 0, %s78
      %s95 = sphi 0, %s79
      %s101 = sphi 0, %s103
      %s104 = sphi 0, %s101
      %s105 = sphi 0, %s104
      %s121 = sphi 0, %s105
      %s129 = sphi 0, %s131
      %s132 = sphi 0, %s129
      %s133 = sphi 0, %s132
      %s149 = sphi 0, %s133
    $region4: #{tpu_custom_call.1} parent=1 // loop_header_branch
      %19 = sbr.rel (%p17) target = $region8
    $region5: #{tpu_custom_call.1} parent=1 // loop_body
      %s21 = ssub.s32 %s16, 1
      %s22 = ssub.s32 %s16, 2
      %s32 = sadd.s32 1, %s25
      %p33 = scmp.ge.s32.totalorder %s32, 1
      %s34 = scalar_select %p33, 0, %s32
      %s35 = sadd.s32 1, %s24
      %s36 = scalar_select %p33, %s35, %s24
      %p37 = scmp.ge.s32.totalorder %s36, 3
      %s38 = scalar_select %p37, 0, %s36
      %s39 = sadd.s32 1, %s23
      %s40 = scalar_select %p37, %s39, %s23
      %p41 = scmp.ge.s32.totalorder %s40, 1
      %s42 = scalar_select %p41, 0, %s40
      %s43 = ssub.s32 %s23, %s42
      %s44 = ssub.s32 %s25, %s34
      %s45 = sor.u32 %s43, %s44
      %p46 = scmp.eq.s32.totalorder %s45, 0
      %s48 = sadd.s32 %s47, 1
      %s49 = scalar_select %p46, %s47, %s48
      %p52 = pneg %p46
      %p53 = scmp.eq.s32.totalorder %s16, 2
      %p54 = por %p52, %p53
      %p55 = scmp.ne.s32.totalorder %s47, %s50
      %p56 = scmp.eq.s32.totalorder %s16, 0
      %p57 = por %p55, %p56
      %p58 = scmp.ne.s32.totalorder %s47, %s50
      %p59 = scmp.eq.s32.totalorder %s21, 2
      %p60 = por %p58, %p59
      %p61 = scmp.ne.s32.totalorder %s50, %s51
      %p62 = scmp.eq.s32.totalorder %s21, 0
      %p63 = por %p61, %p62
      %p64 = scmp.ne.s32.totalorder %s50, %s51
      %p65 = scmp.eq.s32.totalorder %s22, 2
      %p66 = por %p64, %p65
      %p68 = scmp.ne.s32.totalorder %s51, %s67
      %p69 = scmp.eq.s32.totalorder %s22, 0
      %p70 = por %p68, %p69
      %s71 = ssub.s32 %s25, %s34
      %s72 = ssub.s32 %s24, %s38
      %s73 = sor.u32 %s71, %s72
      %p74 = scmp.eq.s32.totalorder %s73, 0
      %s76 = sadd.s32 %s75, 1
      %s77 = scalar_select %p74, %s75, %s76
      %p80 = pneg %p74
      %p81 = scmp.eq.s32.totalorder %s16, 2
      %p82 = por %p80, %p81
      %p83 = scmp.ne.s32.totalorder %s75, %s78
      %p84 = scmp.eq.s32.totalorder %s16, 0
      %p85 = por %p83, %p84
      %p86 = scmp.ne.s32.totalorder %s75, %s78
      %p87 = scmp.eq.s32.totalorder %s21, 2
      %p88 = por %p86, %p87
      %p89 = scmp.ne.s32.totalorder %s78, %s79
      %p90 = scmp.eq.s32.totalorder %s21, 0
      %p91 = por %p89, %p90
      %p92 = scmp.ne.s32.totalorder %s78, %s79
      %p93 = scmp.eq.s32.totalorder %s22, 2
      %p94 = por %p92, %p93
      %p96 = scmp.ne.s32.totalorder %s79, %s95
      %p97 = scmp.eq.s32.totalorder %s22, 0
      %p98 = por %p96, %p97
      %s99 = ssub.s32 %s24, %s38
      %p100 = scmp.eq.s32.totalorder %s99, 0
      %s102 = sadd.s32 %s101, 1
      %s103 = scalar_select %p100, %s101, %s102
      %p106 = pneg %p100
      %p107 = scmp.eq.s32.totalorder %s16, 2
      %p108 = por %p106, %p107
      %p109 = scmp.ne.s32.totalorder %s101, %s104
      %p110 = scmp.eq.s32.totalorder %s16, 0
      %p111 = por %p109, %p110
      %p112 = scmp.ne.s32.totalorder %s101, %s104
      %p113 = scmp.eq.s32.totalorder %s21, 2
      %p114 = por %p112, %p113
      %p115 = scmp.ne.s32.totalorder %s104, %s105
      %p116 = scmp.eq.s32.totalorder %s21, 0
      %p117 = por %p115, %p116
      %p118 = scmp.ne.s32.totalorder %s104, %s105
      %p119 = scmp.eq.s32.totalorder %s22, 2
      %p120 = por %p118, %p119
      %p122 = scmp.ne.s32.totalorder %s105, %s121
      %p123 = scmp.eq.s32.totalorder %s22, 0
      %p124 = por %p122, %p123
      %s125 = ssub.s32 %s23, %s42
      %s126 = ssub.s32 %s24, %s38
      %s127 = sor.u32 %s125, %s126
      %p128 = scmp.eq.s32.totalorder %s127, 0
      %s130 = sadd.s32 %s129, 1
      %s131 = scalar_select %p128, %s129, %s130
      %p134 = pneg %p128
      %p135 = scmp.eq.s32.totalorder %s16, 2
      %p136 = por %p134, %p135
      %p137 = scmp.ne.s32.totalorder %s129, %s132
      %p138 = scmp.eq.s32.totalorder %s16, 0
      %p139 = por %p137, %p138
      %p140 = scmp.ne.s32.totalorder %s129, %s132
      %p141 = scmp.eq.s32.totalorder %s21, 2
      %p142 = por %p140, %p141
      %p143 = scmp.ne.s32.totalorder %s132, %s133
      %p144 = scmp.eq.s32.totalorder %s21, 0
      %p145 = por %p143, %p144
      %p146 = scmp.ne.s32.totalorder %s132, %s133
      %p147 = scmp.eq.s32.totalorder %s22, 2
      %p148 = por %p146, %p147
      %p150 = scmp.ne.s32.totalorder %s133, %s149
      %p151 = scmp.eq.s32.totalorder %s22, 0
      %p152 = por %p150, %p151
      %p153 = scmp.le.s32.totalorder 1, %s16
      %p154 = scmp.lt.s32.totalorder %s16, 4
      %p155 = pnand %p153, %p154
      %p156 = pneg %p155
      // Predicated region
      $region9: #{tpu_custom_call.1} parent=5 // pred_check
        _
      $region10: #{tpu_custom_call.1} parent=5 // pred_check_branch
        %158 = sbr.rel (%p155) target = $region12
      $region11: #{tpu_custom_call.1} parent=5 // pred_region
        %s159 = ssub.s32 %s16, 1
        // Predicated region
        $region13: #{tpu_custom_call.1} parent=11 // pred_check
          %p160 = pneg %p63
        $region14: #{tpu_custom_call.1} parent=11 // pred_check_branch
          %162 = sbr.rel (%p160) target = $region16
        $region15: #{tpu_custom_call.1} parent=11 // pred_region
          %s163 = smul.u32 2, %s26
          %s164 = smul.u32 2, %s28
          %166 = vsyncadd [#allocation4], 0
          %s167 = smul.addr %s163, 2
          %s168 = sadd.s32 %s164, %s167
          %s169 = smul.addr %s168, 8
          %s170 = scalar_lea.hbm %s0, %s169
          %s171 = sshll.u32 %s170, 4
          %s172 = int_to_ptr.hbm [resolvable:$true] %s171
          %s173 = sshll.u32 [#allocation3], 4
          %s174 = int_to_ptr.vmem [resolvable:$true] %s173
          %179 = dma.hbm_to_vmem [thread:$0]  %s172, 512, %s174, [#allocation4], 256, 256, 16
        $region16: #{tpu_custom_call.1} parent=11 // pred_fallthru
          _
      $region12: #{tpu_custom_call.1} parent=5 // pred_fallthru
        _
      %p180 = scmp.lt.s32.totalorder %s16, 3
      // Predicated region
      $region17: #{tpu_custom_call.1} parent=5 // pred_check
        %p181 = pneg %p180
      $region18: #{tpu_custom_call.1} parent=5 // pred_check_branch
        %183 = sbr.rel (%p181) target = $region20
      $region19: #{tpu_custom_call.1} parent=5 // pred_region
        // Predicated region
        $region21: #{tpu_custom_call.1} parent=19 // pred_check
          %p184 = pneg %p85
        $region22: #{tpu_custom_call.1} parent=19 // pred_check_branch
          %186 = sbr.rel (%p184) target = $region24
        $region23: #{tpu_custom_call.1} parent=19 // pred_region
          %s187 = sand.u32 %s16, 1
          %s188 = scalar_lea.sflag [#allocation7], %s187
          %s189 = sand.u32 %s75, 1
          %s190 = smul.addr %s189, 512
          %s191 = scalar_lea.vmem [#allocation6], %s190
          %s192 = smul.u32 32, %s25
          %s193 = smul.u32 2, %s24
          %195 = vsyncadd %s188, 0
          %s196 = smul.addr %s192, 6
          %s197 = sadd.s32 %s193, %s196
          %s198 = smul.addr %s197, 8
          %s199 = scalar_lea.hbm %s1, %s198
          %s200 = sshll.u32 %s199, 4
          %s201 = int_to_ptr.hbm [resolvable:$true] %s200
          %s202 = sshll.u32 %s191, 4
          %s203 = int_to_ptr.vmem [resolvable:$true] %s202
          %208 = dma.hbm_to_vmem [thread:$0]  %s201, 8192, %s203, %s188, 768, 256, 16
        $region24: #{tpu_custom_call.1} parent=19 // pred_fallthru
          _
        // Predicated region
        $region25: #{tpu_custom_call.1} parent=19 // pred_check
          %p209 = pneg %p111
        $region26: #{tpu_custom_call.1} parent=19 // pred_check_branch
          %211 = sbr.rel (%p209) target = $region28
        $region27: #{tpu_custom_call.1} parent=19 // pred_region
          %s212 = sand.u32 %s16, 1
          %s213 = scalar_lea.sflag [#allocation7], %s212
          %s214 = sand.u32 %s101, 1
          %s215 = smul.addr %s214, 2
          %s216 = scalar_lea.vmem [#allocation8], %s215
          %s217 = smul.u32 2, %s24
          %219 = vsyncadd %s213, 0
          %s220 = scalar_lea.hbm %s2, %s217
          %s222 = sshll.u32 %s220, 4
          %s223 = int_to_ptr.hbm [resolvable:$true] %s222
          %s224 = sshll.u32 %s216, 4
          %s225 = int_to_ptr.vmem [resolvable:$true] %s224
          %227 = dma.hbm_to_vmem [thread:$0]  %s223, 32, %s225, %s213
        $region28: #{tpu_custom_call.1} parent=19 // pred_fallthru
          _
      $region20: #{tpu_custom_call.1} parent=5 // pred_fallthru
        _
      %p228 = scmp.le.s32.totalorder 1, %s16
      %p229 = scmp.lt.s32.totalorder %s16, 4
      %p230 = pnand %p228, %p229
      %p231 = pneg %p230
      // Predicated region
      $region29: #{tpu_custom_call.1} parent=5 // pred_check
        _
      $region30: #{tpu_custom_call.1} parent=5 // pred_check_branch
        %233 = sbr.rel (%p230) target = $region32
      $region31: #{tpu_custom_call.1} parent=5 // pred_region
        %s234 = ssub.s32 %s16, 1
        // Predicated region
        $region33: #{tpu_custom_call.1} parent=31 // pred_check
          %p235 = pneg %p63
        $region34: #{tpu_custom_call.1} parent=31 // pred_check_branch
          %237 = sbr.rel (%p235) target = $region36
        $region35: #{tpu_custom_call.1} parent=31 // pred_region
          %239 = dma.done [#allocation4], 512
        $region36: #{tpu_custom_call.1} parent=31 // pred_fallthru
          _
        %s240 = sand.u32 %s21, 1
        %s241 = scalar_lea.sflag [#allocation7], %s240
        %s242 = sand.u32 %s78, 1
        %s243 = smul.addr %s242, 512
        %s244 = scalar_lea.vmem [#allocation6], %s243
        // Predicated region
        $region37: #{tpu_custom_call.1} parent=31 // pred_check
          %p245 = pneg %p91
        $region38: #{tpu_custom_call.1} parent=31 // pred_check_branch
          %247 = sbr.rel (%p245) target = $region40
        $region39: #{tpu_custom_call.1} parent=31 // pred_region
          %249 = dma.done %s241, 8192
        $region40: #{tpu_custom_call.1} parent=31 // pred_fallthru
          _
        %s250 = sand.u32 %s21, 1
        %s251 = scalar_lea.sflag [#allocation7], %s250
        %s252 = sand.u32 %s104, 1
        %s253 = smul.addr %s252, 2
        %s254 = scalar_lea.vmem [#allocation8], %s253
        // Predicated region
        $region41: #{tpu_custom_call.1} parent=31 // pred_check
          %p255 = pneg %p117
        $region42: #{tpu_custom_call.1} parent=31 // pred_check_branch
          %257 = sbr.rel (%p255) target = $region44
        $region43: #{tpu_custom_call.1} parent=31 // pred_region
          %259 = dma.done %s251, 32
        $region44: #{tpu_custom_call.1} parent=31 // pred_fallthru
          _
        %p260 = pneg %p63
        %p261 = pneg %p60
        %s262 = sand.u32 %s21, 1
        %s263 = scalar_lea.sflag [#allocation7], %s262
        %s264 = sand.u32 %s78, 1
        %s265 = smul.addr %s264, 512
        %s266 = scalar_lea.vmem [#allocation6], %s265
        %p267 = pneg %p91
        %p268 = pneg %p88
        %s269 = sand.u32 %s21, 1
        %s270 = scalar_lea.sflag [#allocation7], %s269
        %s271 = sand.u32 %s104, 1
        %s272 = smul.addr %s271, 2
        %s273 = scalar_lea.vmem [#allocation8], %s272
        %p274 = pneg %p117
        %p275 = pneg %p114
        %p276 = pneg %p145
        %p277 = pneg %p142
        %s278 = sand.u32 %s132, 1
        %s279 = scalar_lea.sflag [#allocation5], %s278
        %s280 = sand.u32 %s132, 1
        %s281 = smul.addr %s280, 32
        %s282 = scalar_lea.vmem [#allocation9], %s281
        %s283 = smul.u32 2, %s26
        %s284 = smul.u32 2, %s28
        %s285 = smul.u32 32, %s28
        %s286 = smul.u32 2, %s27
        %s287 = smul.u32 2, %s27
        %s288 = smul.u32 2, %s26
        %s289 = smul.u32 2, %s27
        %p290 = scmp.eq.s32.totalorder %s28, 0
        // Predicated region
        $region45: #{tpu_custom_call.1} parent=31 // pred_check
          %p291 = pneg %p290
        $region46: #{tpu_custom_call.1} parent=31 // pred_check_branch
          %293 = sbr.rel (%p291) target = $region48
        $region47: #{tpu_custom_call.1} parent=31 // pred_region
          %294 = vst [vmem:[#allocation2] sm:$0xff] 0.0
          %295 = vst [vmem:[#allocation2 + $0x8] sm:$0xff] 0.0
          %296 = vst [vmem:[#allocation2 + $0x10] sm:$0xff] 0.0
          %297 = vst [vmem:[#allocation2 + $0x18] sm:$0xff] 0.0
        $region48: #{tpu_custom_call.1} parent=31 // pred_fallthru
          _
        %v298 = vld [vmem:[#allocation2] sm:$0xff]
        %v299 = vld [vmem:[#allocation2 + $0x8] sm:$0xff]
        %v300 = vld [vmem:[#allocation2 + $0x10] sm:$0xff]
        %v301 = vld [vmem:[#allocation2 + $0x18] sm:$0xff]
        %v302 = vld [vmem:[#allocation3] sm:$0xff]
        %v303 = vld [vmem:[#allocation3 + $0x8] sm:$0xff]
        %v304 = vld [vmem:[#allocation3 + $0x10] sm:$0xff]
        %v305 = vld [vmem:[#allocation3 + $0x18] sm:$0xff]
        %v306 = vld [vmem:[%s244] sm:$0xff]
        %v307 = vld [vmem:[%s244 + $0x8] sm:$0xff]
        %v308 = vld [vmem:[%s244 + $0x10] sm:$0xff]
        %v309 = vld [vmem:[%s244 + $0x18] sm:$0xff]
        %v310 = vld [vmem:[%s244 + $0x20] sm:$0xff]
        %v311 = vld [vmem:[%s244 + $0x28] sm:$0xff]
        %v312 = vld [vmem:[%s244 + $0x30] sm:$0xff]
        %v313 = vld [vmem:[%s244 + $0x38] sm:$0xff]
        %v314 = vld [vmem:[%s244 + $0x40] sm:$0xff]
        %v315 = vld [vmem:[%s244 + $0x48] sm:$0xff]
        %v316 = vld [vmem:[%s244 + $0x50] sm:$0xff]
        %v317 = vld [vmem:[%s244 + $0x58] sm:$0xff]
        %v318 = vld [vmem:[%s244 + $0x60] sm:$0xff]
        %v319 = vld [vmem:[%s244 + $0x68] sm:$0xff]
        %v320 = vld [vmem:[%s244 + $0x70] sm:$0xff]
        %v321 = vld [vmem:[%s244 + $0x78] sm:$0xff]
        %v322 = vld [vmem:[%s244 + $0x80] sm:$0xff]
        %v323 = vld [vmem:[%s244 + $0x88] sm:$0xff]
        %v324 = vld [vmem:[%s244 + $0x90] sm:$0xff]
        %v325 = vld [vmem:[%s244 + $0x98] sm:$0xff]
        %v326 = vld [vmem:[%s244 + $0xa0] sm:$0xff]
        %v327 = vld [vmem:[%s244 + $0xa8] sm:$0xff]
        %v328 = vld [vmem:[%s244 + $0xb0] sm:$0xff]
        %v329 = vld [vmem:[%s244 + $0xb8] sm:$0xff]
        %v330 = vld [vmem:[%s244 + $0xc0] sm:$0xff]
        %v331 = vld [vmem:[%s244 + $0xc8] sm:$0xff]
        %v332 = vld [vmem:[%s244 + $0xd0] sm:$0xff]
        %v333 = vld [vmem:[%s244 + $0xd8] sm:$0xff]
        %v334 = vld [vmem:[%s244 + $0xe0] sm:$0xff]
        %v335 = vld [vmem:[%s244 + $0xe8] sm:$0xff]
        %v336 = vld [vmem:[%s244 + $0xf0] sm:$0xff]
        %v337 = vld [vmem:[%s244 + $0xf8] sm:$0xff]
        %v338 = vld [vmem:[%s244 + $0x100] sm:$0xff]
        %v339 = vld [vmem:[%s244 + $0x108] sm:$0xff]
        %v340 = vld [vmem:[%s244 + $0x110] sm:$0xff]
        %v341 = vld [vmem:[%s244 + $0x118] sm:$0xff]
        %v342 = vld [vmem:[%s244 + $0x120] sm:$0xff]
        %v343 = vld [vmem:[%s244 + $0x128] sm:$0xff]
        %v344 = vld [vmem:[%s244 + $0x130] sm:$0xff]
        %v345 = vld [vmem:[%s244 + $0x138] sm:$0xff]
        %v346 = vld [vmem:[%s244 + $0x140] sm:$0xff]
        %v347 = vld [vmem:[%s244 + $0x148] sm:$0xff]
        %v348 = vld [vmem:[%s244 + $0x150] sm:$0xff]
        %v349 = vld [vmem:[%s244 + $0x158] sm:$0xff]
        %v350 = vld [vmem:[%s244 + $0x160] sm:$0xff]
        %v351 = vld [vmem:[%s244 + $0x168] sm:$0xff]
        %v352 = vld [vmem:[%s244 + $0x170] sm:$0xff]
        %v353 = vld [vmem:[%s244 + $0x178] sm:$0xff]
        %v354 = vld [vmem:[%s244 + $0x180] sm:$0xff]
        %v355 = vld [vmem:[%s244 + $0x188] sm:$0xff]
        %v356 = vld [vmem:[%s244 + $0x190] sm:$0xff]
        %v357 = vld [vmem:[%s244 + $0x198] sm:$0xff]
        %v358 = vld [vmem:[%s244 + $0x1a0] sm:$0xff]
        %v359 = vld [vmem:[%s244 + $0x1a8] sm:$0xff]
        %v360 = vld [vmem:[%s244 + $0x1b0] sm:$0xff]
        %v361 = vld [vmem:[%s244 + $0x1b8] sm:$0xff]
        %v362 = vld [vmem:[%s244 + $0x1c0] sm:$0xff]
        %v363 = vld [vmem:[%s244 + $0x1c8] sm:$0xff]
        %v364 = vld [vmem:[%s244 + $0x1d0] sm:$0xff]
        %v365 = vld [vmem:[%s244 + $0x1d8] sm:$0xff]
        %v366 = vld [vmem:[%s244 + $0x1e0] sm:$0xff]
        %v367 = vld [vmem:[%s244 + $0x1e8] sm:$0xff]
        %v368 = vld [vmem:[%s244 + $0x1f0] sm:$0xff]
        %v369 = vld [vmem:[%s244 + $0x1f8] sm:$0xff]
        %370 = vmatpush.msra.mxu0 %v336
        %371 = vmatpush.msra.mxu0 %v334
        %372 = vmatpush.msra.mxu0 %v332
        %373 = vmatpush.msra.mxu0 %v330
        %374 = vmatpush.msra.mxu0 %v328
        %375 = vmatpush.msra.mxu0 %v326
        %376 = vmatpush.msra.mxu0 %v324
        %377 = vmatpush.msra.mxu0 %v322
        %378 = vmatpush.msra.mxu0 %v320
        %379 = vmatpush.msra.mxu0 %v318
        %380 = vmatpush.msra.mxu0 %v316
        %381 = vmatpush.msra.mxu0 %v314
        %382 = vmatpush.msra.mxu0 %v312
        %383 = vmatpush.msra.mxu0 %v310
        %384 = vmatpush.msra.mxu0 %v308
        %385 = vmatpush.msra.mxu0 %v306
        %386 = vmatmul.f32.gmra.mxu0 %v302
        %v387 = vpop.f32.mrf.mxu0
        %v388 = vadd.f32 0.0, %v387
        %389 = vmatmul.f32.gmra.mxu0 %v304
        %v390 = vpop.f32.mrf.mxu0
        %v391 = vadd.f32 0.0, %v390
        %392 = vdwg.mxu0
        %393 = vmatpush.msra.mxu0 %v368
        %394 = vmatpush.msra.mxu0 %v366
        %395 = vmatpush.msra.mxu0 %v364
        %396 = vmatpush.msra.mxu0 %v362
        %397 = vmatpush.msra.mxu0 %v360
        %398 = vmatpush.msra.mxu0 %v358
        %399 = vmatpush.msra.mxu0 %v356
        %400 = vmatpush.msra.mxu0 %v354
        %401 = vmatpush.msra.mxu0 %v352
        %402 = vmatpush.msra.mxu0 %v350
        %403 = vmatpush.msra.mxu0 %v348
        %404 = vmatpush.msra.mxu0 %v346
        %405 = vmatpush.msra.mxu0 %v344
        %406 = vmatpush.msra.mxu0 %v342
        %407 = vmatpush.msra.mxu0 %v340
        %408 = vmatpush.msra.mxu0 %v338
        %409 = vmatmul.f32.gmra.mxu0 %v303
        %v410 = vpop.f32.mrf.mxu0
        %v411 = vadd.f32 %v388, %v410
        %412 = vmatmul.f32.gmra.mxu0 %v305
        %v413 = vpop.f32.mrf.mxu0
        %v414 = vadd.f32 %v391, %v413
        %415 = vdwg.mxu0
        %416 = vmatpush.msra.mxu0 %v337
        %417 = vmatpush.msra.mxu0 %v335
        %418 = vmatpush.msra.mxu0 %v333
        %419 = vmatpush.msra.mxu0 %v331
        %420 = vmatpush.msra.mxu0 %v329
        %421 = vmatpush.msra.mxu0 %v327
        %422 = vmatpush.msra.mxu0 %v325
        %423 = vmatpush.msra.mxu0 %v323
        %424 = vmatpush.msra.mxu0 %v321
        %425 = vmatpush.msra.mxu0 %v319
        %426 = vmatpush.msra.mxu0 %v317
        %427 = vmatpush.msra.mxu0 %v315
        %428 = vmatpush.msra.mxu0 %v313
        %429 = vmatpush.msra.mxu0 %v311
        %430 = vmatpush.msra.mxu0 %v309
        %431 = vmatpush.msra.mxu0 %v307
        %432 = vmatmul.f32.gmra.mxu0 %v302
        %v433 = vpop.f32.mrf.mxu0
        %v434 = vadd.f32 0.0, %v433
        %435 = vmatmul.f32.gmra.mxu0 %v304
        %v436 = vpop.f32.mrf.mxu0
        %v437 = vadd.f32 0.0, %v436
        %438 = vdwg.mxu0
        %439 = vmatpush.msra.mxu0 %v369
        %440 = vmatpush.msra.mxu0 %v367
        %441 = vmatpush.msra.mxu0 %v365
        %442 = vmatpush.msra.mxu0 %v363
        %443 = vmatpush.msra.mxu0 %v361
        %444 = vmatpush.msra.mxu0 %v359
        %445 = vmatpush.msra.mxu0 %v357
        %446 = vmatpush.msra.mxu0 %v355
        %447 = vmatpush.msra.mxu0 %v353
        %448 = vmatpush.msra.mxu0 %v351
        %449 = vmatpush.msra.mxu0 %v349
        %450 = vmatpush.msra.mxu0 %v347
        %451 = vmatpush.msra.mxu0 %v345
        %452 = vmatpush.msra.mxu0 %v343
        %453 = vmatpush.msra.mxu0 %v341
        %454 = vmatpush.msra.mxu0 %v339
        %455 = vmatmul.f32.gmra.mxu0 %v303
        %v456 = vpop.f32.mrf.mxu0
        %v457 = vadd.f32 %v434, %v456
        %458 = vmatmul.f32.gmra.mxu0 %v305
        %v459 = vpop.f32.mrf.mxu0
        %v460 = vadd.f32 %v437, %v459
        %461 = vdwg.mxu0
        %v462 = vadd.f32 %v298, %v411
        %v463 = vadd.f32 %v299, %v457
        %v464 = vadd.f32 %v300, %v414
        %v465 = vadd.f32 %v301, %v460
        %466 = vst [vmem:[#allocation2] sm:$0xff] %v462
        %467 = vst [vmem:[#allocation2 + $0x8] sm:$0xff] %v463
        %468 = vst [vmem:[#allocation2 + $0x10] sm:$0xff] %v464
        %469 = vst [vmem:[#allocation2 + $0x18] sm:$0xff] %v465
        // Predicated region
        $region49: #{tpu_custom_call.1} parent=31 // pred_check
          %p470 = pneg %p290
        $region50: #{tpu_custom_call.1} parent=31 // pred_check_branch
          %472 = sbr.rel (%p470) target = $region52
        $region51: #{tpu_custom_call.1} parent=31 // pred_region
          %v473 = vld [vmem:[#allocation2] sm:$0xff]
          %v474 = vld [vmem:[#allocation2 + $0x8] sm:$0xff]
          %v475 = vld [vmem:[#allocation2 + $0x10] sm:$0xff]
          %v476 = vld [vmem:[#allocation2 + $0x18] sm:$0xff]
          %v477 = vld [vmem:[%s254] sm:$0x3]
          %v479 = vperm.slane %v477, 0
          %v480 = vperm.slane %v477, 1
          %v483 = vadd.f32 %v473, %v479
          %v484 = vadd.f32 %v474, %v480
          %v485 = vadd.f32 %v475, %v479
          %v486 = vadd.f32 %v476, %v480
          %487 = vst [vmem:[%s282] sm:$0xff] %v483
          %488 = vst [vmem:[%s282 + $0x8] sm:$0xff] %v484
          %489 = vst [vmem:[%s282 + $0x10] sm:$0xff] %v485
          %490 = vst [vmem:[%s282 + $0x18] sm:$0xff] %v486
        $region52: #{tpu_custom_call.1} parent=31 // pred_fallthru
          _
        %s491 = sand.u32 %s132, 1
        %s492 = scalar_lea.sflag [#allocation5], %s491
        %s493 = sand.u32 %s132, 1
        %s494 = smul.addr %s493, 32
        %s495 = scalar_lea.vmem [#allocation9], %s494
        // Predicated region
        $region53: #{tpu_custom_call.1} parent=31 // pred_check
          %p496 = pneg %p142
        $region54: #{tpu_custom_call.1} parent=31 // pred_check_branch
          %498 = sbr.rel (%p496) target = $region56
        $region55: #{tpu_custom_call.1} parent=31 // pred_region
          %s499 = smul.u32 2, %s26
          %s500 = smul.u32 2, %s27
          %502 = vsyncadd %s492, 0
          %s503 = smul.addr %s499, 6
          %s504 = sadd.s32 %s500, %s503
          %s505 = smul.addr %s504, 8
          %s506 = scalar_lea.hbm %s3, %s505
          %s507 = sshll.u32 %s495, 4
          %s508 = int_to_ptr.vmem [resolvable:$true] %s507
          %s509 = sshll.u32 %s506, 4
          %s510 = int_to_ptr.hbm [resolvable:$true] %s509
          %515 = dma.vmem_to_hbm [thread:$0]  %s508, 512, %s510, %s492, 256, 768, 16
        $region56: #{tpu_custom_call.1} parent=31 // pred_fallthru
          _
      $region32: #{tpu_custom_call.1} parent=5 // pred_fallthru
        _
      %p516 = scmp.le.s32.totalorder 2, %s16
      // Predicated region
      $region57: #{tpu_custom_call.1} parent=5 // pred_check
        %p517 = pneg %p516
      $region58: #{tpu_custom_call.1} parent=5 // pred_check_branch
        %519 = sbr.rel (%p517) target = $region60
      $region59: #{tpu_custom_call.1} parent=5 // pred_region
        %s520 = ssub.s32 %s16, 2
        // Predicated region
        $region61: #{tpu_custom_call.1} parent=59 // pred_check
          %p521 = pneg %p148
        $region62: #{tpu_custom_call.1} parent=59 // pred_check_branch
          %523 = sbr.rel (%p521) target = $region64
        $region63: #{tpu_custom_call.1} parent=59 // pred_region
          %s524 = sand.u32 %s133, 1
          %s525 = scalar_lea.sflag [#allocation5], %s524
          %s526 = sand.u32 %s133, 1
          %s527 = smul.addr %s526, 32
          %s528 = scalar_lea.vmem [#allocation9], %s527
          %530 = dma.done %s525, 512
        $region64: #{tpu_custom_call.1} parent=59 // pred_fallthru
          _
      $region60: #{tpu_custom_call.1} parent=5 // pred_fallthru
        _
    $region6: #{tpu_custom_call.1} parent=1 // loop_footer
      %s20 = sadd.s32 1, %s16
    $region7: #{tpu_custom_call.1} parent=1 // loop_footer_branch
      %15 = sbr.rel target = $region3
    $region8: #{tpu_custom_call.1} parent=1 // loop_exit
      _
    %531 = vsyncpa [#allocation4], 1
    %s532 = scalar_lea.sflag [#allocation4], 1
    %533 = vsyncpa %s532, 1
    %534 = vsyncpa [#allocation7], 1
    %s535 = scalar_lea.sflag [#allocation7], 1
    %536 = vsyncpa %s535, 1
    %537 = vsyncpa [#allocation5], 1
    %s538 = scalar_lea.sflag [#allocation5], 1
    %539 = vsyncpa %s538, 1

</llo_original>
